<compile_context>
chip_gen: v7x
topology: tpu7x:2x2x1
jax: 0.10.0
libtpu: 0.0.40
codegen_flags: <defaults>
</compile_context>

<pallas_src>
import functools
import math
import numpy as np
import jax
import jax.numpy as jnp
from jax import lax
from jax.experimental import pallas as pl
from jax.experimental.pallas import tpu as pltpu

KERNEL_SIZE = 7
NUM_ORIENT = 8
NUM_SCALES = 3
NUM_FILTERS = NUM_ORIENT * NUM_SCALES   # 24
GABOR_OUT = 64


def _gabor_bank():
    """(NUM_FILTERS, K, K) Gabor bank, exactly mirroring TextureGaborFilters'
    parameter initialization and get_gabor_kernel()."""
    ks = KERNEL_SIZE
    sigma = jnp.array([(i + 1) * 0.56 * ks / NUM_SCALES for i in range(NUM_SCALES)], jnp.float32)
    theta = jnp.array([i * math.pi / NUM_ORIENT for i in range(NUM_ORIENT)], jnp.float32)
    lambd = jnp.array([10.0 / (i + 1) for i in range(NUM_SCALES)], jnp.float32)
    gamma = jnp.float32(0.5)
    psi = jnp.float32(0.0)
    lin = jnp.linspace(-ks / 2.0, ks / 2.0, ks)
    y, x = jnp.meshgrid(lin, lin, indexing="ij")        # torch.meshgrid default ('ij')
    kernels = []
    for s in range(NUM_SCALES):                          # same (scale, orientation) order
        for o in range(NUM_ORIENT):
            xt = x * jnp.cos(theta[o]) + y * jnp.sin(theta[o])
            yt = -x * jnp.sin(theta[o]) + y * jnp.cos(theta[o])
            gb = jnp.exp(-0.5 * (xt ** 2 + gamma ** 2 * yt ** 2) / sigma[s] ** 2) * \
                 jnp.cos(2.0 * math.pi * xt / lambd[s] + psi)
            kernels.append(gb.astype(jnp.float32))
    return jnp.stack(kernels, axis=0)


def _round_up(n, m):
    return ((n + m - 1) // m) * m


# ------------------------- fused Pallas kernel -------------------------

def fused_backbone_kernel(p_ref, kw1_ref, b1_ref, w2_ref, b2_ref, out_ref, *,
                          batch, hw, inv_hw):
    """Single grid step over the whole (folded) problem.

    p:   (B*HW, Kp)  bf16  im2col slab (contraction dim zero-padded to Kp)
    kw1: (Kp, hid)   bf16  folded (collapsed Gabor conv) @ (head 1x1 conv) weights
    b1:  (1, hid)    f32   folded bias: gabor_bias @ w1 + b1
    w2:  (hid, NCP)  f32   classifier, classes zero-padded to 128 (lane-dense)
    b2:  (1, NCP)    f32
    out: (B, NCP)    f32
    """
    # One big MXU matmul (f32 accumulation) + f32 bias + ReLU on the VPU.
    h = jnp.dot(p_ref[...], kw1_ref[...], preferred_element_type=jnp.float32) + b1_ref[...]
    h = jnp.maximum(h, 0.0)
    # Per-image global average pool: split batch off the M dim (layout no-op) and
    # sublane-reduce; scale by constant 1/(H*W) (keeps the divide off the VALU).
    pooled = jnp.sum(h.reshape(batch, hw, h.shape[-1]), axis=1) * inv_hw        # (B, hid)
    # Classifier epilogue on the (otherwise idle) MXU; output is lane-dense (NCP=128).
    # Per review this could also be a VPU broadcast-reduce or be hoisted to the wrapper.
    logits = jnp.dot(pooled, w2_ref[...], preferred_element_type=jnp.float32) + b2_ref[...]
    out_ref[...] = logits


# ------------------------- wrapper -------------------------

def texture_enhanced_backbone_forward(x_nchw, params):
    """TextureEnhancedBackbone.forward (use_gabor=True, non-ResNet base_model)."""
    B, C, H, W = x_nchw.shape
    pad = KERNEL_SIZE // 2
    HW = H * W
    K2 = KERNEL_SIZE * KERNEL_SIZE
    K2C = K2 * C                                        # 49 * C = 196
    Kp = _round_up(K2C, 128)                            # 256: MXU-friendly contraction depth
    hid = params["w1"].shape[1]
    nc = params["w2"].shape[1]
    NCP = _round_up(nc, 128)                            # lane-dense class dim

    # --- im2col as ONE fused grouped identity conv (layout plumbing, no compute hoisted) ---
    # Group c emits K2 output channels in row-major (ky, kx) order -> feature order (c, ky, kx).
    eye = jnp.eye(K2, dtype=x_nchw.dtype).reshape(K2, KERNEL_SIZE, KERNEL_SIZE)
    patch_kernel = jnp.tile(eye, (C, 1, 1))[:, None, :, :]          # (C*K2, 1, K, K)  OIHW
    patches = lax.conv_general_dilated(
        x_nchw, patch_kernel, (1, 1), [(pad, pad), (pad, pad)],
        dimension_numbers=("NCHW", "OIHW", "NCHW"), feature_group_count=C)  # (B, C*K2, H, W)
    patches = jnp.transpose(patches, (0, 2, 3, 1)).reshape(B * HW, K2C)
    patches = jnp.pad(patches, ((0, 0), (0, Kp - K2C)))              # zero-pad: exact
    patches = patches.astype(jnp.bfloat16)                           # bf16 MXU operand

    # --- exact f32 algebraic folds; single cast to bf16 at the end ---
    gb = _gabor_bank()
    # Collapsed dense 7x7 conv kernel in (c, ky, kx) order to match the patch layout.
    keff = jnp.einsum("ofc,fij->cijo", params["filter_w"].astype(jnp.float32), gb)
    keff = keff.reshape(K2C, GABOR_OUT)                              # (K2C, 64) f32
    w1 = params["w1"].astype(jnp.float32)
    kw1 = keff @ w1                                                  # (K2C, hid) f32 fold
    kw1 = jnp.pad(kw1, ((0, Kp - K2C), (0, 0))).astype(jnp.bfloat16)  # (Kp, hid) bf16
    bias1 = (params["gabor_bias"].astype(jnp.float32) @ w1
             + params["b1"].astype(jnp.float32)).reshape(1, hid)      # folded bias, f32
    w2p = jnp.pad(params["w2"].astype(jnp.float32), ((0, 0), (0, NCP - nc)))
    b2p = jnp.pad(params["b2"].astype(jnp.float32).reshape(1, nc), ((0, 0), (0, NCP - nc)))

    BHW = B * HW
    kernel = functools.partial(fused_backbone_kernel, batch=B, hw=HW, inv_hw=1.0 / HW)
    cost = pl.CostEstimate(
        flops=2 * BHW * Kp * hid + 2 * BHW * hid + 2 * B * hid * NCP,
        transcendentals=0,
        bytes_accessed=(patches.size * 2 + kw1.size * 2
                        + (bias1.size + w2p.size + b2p.size + B * NCP) * 4),
    )
    out = pl.pallas_call(
        kernel,
        out_shape=jax.ShapeDtypeStruct((B, NCP), jnp.float32),
        grid=(1,),
        in_specs=[
            pl.BlockSpec((BHW, Kp), lambda i: (0, 0)),
            pl.BlockSpec((Kp, hid), lambda i: (0, 0)),
            pl.BlockSpec((1, hid), lambda i: (0, 0)),
            pl.BlockSpec((hid, NCP), lambda i: (0, 0)),
            pl.BlockSpec((1, NCP), lambda i: (0, 0)),
        ],
        out_specs=pl.BlockSpec((B, NCP), lambda i: (0, 0)),
        compiler_params=pltpu.CompilerParams(dimension_semantics=("arbitrary",)),
        cost_estimate=cost,
    )(patches, kw1, bias1, w2p, b2p)
    return out[:, :nc]


# ------------------------- main -------------------------

if __name__ == "__main__":
    B, C_in, H, W = 2, 4, 16, 16
    HIDDEN, NUM_CLASSES = 32, 10

    key = jax.random.PRNGKey(0)
    kx, kw, kb, k1, kb1, k2, kb2 = jax.random.split(key, 7)
    x = jax.random.normal(kx, (B, C_in, H, W), jnp.float32)   # NCHW like the PyTorch module

    # TextureGaborFilters params: kaiming_uniform(a=sqrt(5)) -> U(+-1/sqrt(fan_in))
    fan_in = NUM_FILTERS * C_in
    bound = 1.0 / math.sqrt(fan_in)
    params = dict(
        filter_w=jax.random.uniform(kw, (GABOR_OUT, NUM_FILTERS, C_in), jnp.float32, -bound, bound),
        gabor_bias=jax.random.uniform(kb, (GABOR_OUT,), jnp.float32, -bound, bound),
        # synthetic base_model head
        w1=jax.random.normal(k1, (GABOR_OUT, HIDDEN), jnp.float32) * 0.05,
        b1=jax.random.normal(kb1, (HIDDEN,), jnp.float32) * 0.01,
        w2=jax.random.normal(k2, (HIDDEN, NUM_CLASSES), jnp.float32) * 0.05,
        b2=jax.random.normal(kb2, (NUM_CLASSES,), jnp.float32) * 0.01,
    )

    # ---- Pallas forward (single fused kernel) ----
    logits = texture_enhanced_backbone_forward(x, params)
    logits = jax.block_until_ready(logits)

    # ---- pure-JAX f32 reference mirroring the PyTorch per-filter depthwise conv path ----
    gbank = _gabor_bank()
    gouts = []
    for f in range(NUM_FILTERS):
        kern = jnp.broadcast_to(gbank[f], (C_in, 1, KERNEL_SIZE, KERNEL_SIZE))  # groups=C_in
        o = lax.conv_general_dilated(
            x, kern, (1, 1), [(3, 3), (3, 3)],
            dimension_numbers=("NCHW", "OIHW", "NCHW"), feature_group_count=C_in)
        gouts.append(o)
    g = jnp.stack(gouts, axis=1)                                                 # (B, F, C, H, W)
    gabor_ref = jnp.einsum("bfchw,ofc->bohw", g, params["filter_w"]) + \
        params["gabor_bias"][None, :, None, None]
    href = jnp.maximum(jnp.einsum("bchw,cd->bhwd", gabor_ref, params["w1"]) + params["b1"], 0.0)
    logits_ref = jnp.mean(href, axis=(1, 2)) @ params["w2"] + params["b2"]

    # Main matmul uses bf16 MXU operands (f32 accumulation, f32 weight fold, single bf16 cast);
    # tolerance sized accordingly.
    np.testing.assert_allclose(np.asarray(logits), np.asarray(logits_ref), rtol=3e-3, atol=3e-3)

    print("KERNEL_OK")
</pallas_src>

<mosaic_0001>
module attributes {stable_mosaic.version = 11 : i64} {
  func.func @fused_backbone_kernel(%arg0: i32, %arg1: memref<512x256xbf16, #tpu.memory_space<vmem>>, %arg2: memref<256x32xbf16, #tpu.memory_space<vmem>>, %arg3: memref<1x32xf32, #tpu.memory_space<vmem>>, %arg4: memref<32x128xf32, #tpu.memory_space<vmem>>, %arg5: memref<1x128xf32, #tpu.memory_space<vmem>>, %arg6: memref<2x128xf32, #tpu.memory_space<vmem>>) attributes {dimension_semantics = [#tpu.dimension_semantics<arbitrary>], iteration_bounds = array<i64: 1>, scalar_prefetch = 0 : i64, scratch_operands = 0 : i64, tpu.core_type = #tpu.core_type<tc>, window_params = [{pipeline_mode = #tpu.pipeline_mode<synchronous>, transform_indices = @transform_0, window_bounds = array<i64: 512, 256>}, {pipeline_mode = #tpu.pipeline_mode<synchronous>, transform_indices = @transform_1, window_bounds = array<i64: 256, 32>}, {pipeline_mode = #tpu.pipeline_mode<synchronous>, transform_indices = @transform_2, window_bounds = array<i64: 1, 32>}, {pipeline_mode = #tpu.pipeline_mode<synchronous>, transform_indices = @transform_3, window_bounds = array<i64: 32, 128>}, {pipeline_mode = #tpu.pipeline_mode<synchronous>, transform_indices = @transform_4, window_bounds = array<i64: 1, 128>}, {pipeline_mode = #tpu.pipeline_mode<synchronous>, transform_indices = @transform_5, window_bounds = array<i64: 2, 128>}]} {
    %c0 = arith.constant 0 : index
    %c0_0 = arith.constant 0 : index
    %0 = vector.load %arg1[%c0, %c0_0] : memref<512x256xbf16, #tpu.memory_space<vmem>>, vector<512x256xbf16>
    %c0_1 = arith.constant 0 : index
    %c0_2 = arith.constant 0 : index
    %1 = vector.load %arg2[%c0_1, %c0_2] : memref<256x32xbf16, #tpu.memory_space<vmem>>, vector<256x32xbf16>
    %cst = arith.constant dense<0.000000e+00> : vector<512x32xf32>
    %2 = tpu.matmul %0, %1, %cst {dimension_numbers = #tpu.dot_dimension_numbers<[1], [0], [0], [1], [0, 0, 1, 1], [], []>} : vector<512x256xbf16>, vector<256x32xbf16>, vector<512x32xf32> -> vector<512x32xf32>
    %c0_3 = arith.constant 0 : index
    %c0_4 = arith.constant 0 : index
    %3 = vector.load %arg3[%c0_3, %c0_4] : memref<1x32xf32, #tpu.memory_space<vmem>>, vector<1x32xf32>
    %4 = vector.broadcast %3 : vector<1x32xf32> to vector<512x32xf32>
    %5 = arith.addf %2, %4 : vector<512x32xf32>
    %cst_5 = arith.constant 0.000000e+00 : f32
    %6 = vector.broadcast %cst_5 : f32 to vector<512x32xf32>
    %7 = arith.maximumf %5, %6 : vector<512x32xf32>
    %8 = vector.shape_cast %7 : vector<512x32xf32> to vector<2x256x32xf32>
    %cst_6 = arith.constant dense<0.000000e+00> : vector<2x32xf32>
    %9 = vector.multi_reduction <add>, %8, %cst_6 [1] : vector<2x256x32xf32> to vector<2x32xf32>
    %cst_7 = arith.constant 3.906250e-03 : f32
    %10 = vector.broadcast %cst_7 : f32 to vector<2x32xf32>
    %11 = arith.mulf %9, %10 : vector<2x32xf32>
    %c0_8 = arith.constant 0 : index
    %c0_9 = arith.constant 0 : index
    %12 = vector.load %arg4[%c0_8, %c0_9] : memref<32x128xf32, #tpu.memory_space<vmem>>, vector<32x128xf32>
    %cst_10 = arith.constant dense<0.000000e+00> : vector<2x128xf32>
    %13 = tpu.matmul %11, %12, %cst_10 {dimension_numbers = #tpu.dot_dimension_numbers<[1], [0], [0], [1], [0, 0, 1, 1], [], []>} : vector<2x32xf32>, vector<32x128xf32>, vector<2x128xf32> -> vector<2x128xf32>
    %c0_11 = arith.constant 0 : index
    %c0_12 = arith.constant 0 : index
    %14 = vector.load %arg5[%c0_11, %c0_12] : memref<1x128xf32, #tpu.memory_space<vmem>>, vector<1x128xf32>
    %15 = vector.broadcast %14 : vector<1x128xf32> to vector<2x128xf32>
    %16 = arith.addf %13, %15 : vector<2x128xf32>
    %c0_13 = arith.constant 0 : index
    %c0_14 = arith.constant 0 : index
    %17 = vector.load %arg6[%c0_13, %c0_14] : memref<2x128xf32, #tpu.memory_space<vmem>>, vector<2x128xf32>
    tpu.vector_store %arg6[%c0_13, %c0_14], %16 {strides = array<i32>} : memref<2x128xf32, #tpu.memory_space<vmem>>, vector<2x128xf32>,
    return
  }
  func.func @transform_0(%arg0: i32) -> (i32, i32) {
    %c0_i32 = arith.constant 0 : i32
    %c0_i32_0 = arith.constant 0 : i32
    %c0_i32_1 = arith.constant 0 : i32
    return %c0_i32, %c0_i32_0 : i32, i32
  }
  func.func @transform_1(%arg0: i32) -> (i32, i32) {
    %c0_i32 = arith.constant 0 : i32
    %c0_i32_0 = arith.constant 0 : i32
    %c0_i32_1 = arith.constant 0 : i32
    return %c0_i32, %c0_i32_0 : i32, i32
  }
  func.func @transform_2(%arg0: i32) -> (i32, i32) {
    %c0_i32 = arith.constant 0 : i32
    %c0_i32_0 = arith.constant 0 : i32
    %c0_i32_1 = arith.constant 0 : i32
    return %c0_i32, %c0_i32_0 : i32, i32
  }
  func.func @transform_3(%arg0: i32) -> (i32, i32) {
    %c0_i32 = arith.constant 0 : i32
    %c0_i32_0 = arith.constant 0 : i32
    %c0_i32_1 = arith.constant 0 : i32
    return %c0_i32, %c0_i32_0 : i32, i32
  }
  func.func @transform_4(%arg0: i32) -> (i32, i32) {
    %c0_i32 = arith.constant 0 : i32
    %c0_i32_0 = arith.constant 0 : i32
    %c0_i32_1 = arith.constant 0 : i32
    return %c0_i32, %c0_i32_0 : i32, i32
  }
  func.func @transform_5(%arg0: i32) -> (i32, i32) {
    %c0_i32 = arith.constant 0 : i32
    %c0_i32_0 = arith.constant 0 : i32
    %c0_i32_1 = arith.constant 0 : i32
    return %c0_i32, %c0_i32_0 : i32, i32
  }
}

</mosaic_0001>

<llo_original>
// kernel: tpu_custom_call.1
$region0: #{tpu_custom_call.1}
  #allocation0 [shape = 'u32[]', space=smem, size = 0x4, offset = 0x4, fixed_abs, tag = 'smem constant byte address 0x4 - core index']
  #allocation1 [shape = 'u32[144,128]{1,0:T(1,128)}', space=vmem, size = 0x12000, scoped, tag = 'internal scratch']
  %s0 = inlined_call_operand.hbm [shape: bf16[512,256], index: 0, kind: input, shape index: {}]
  %s1 = inlined_call_operand.vmem [shape: bf16[256,32], index: 1, kind: input, shape index: {}]
  %s2 = inlined_call_operand.vmem [shape: f32[1,32], index: 2, kind: input, shape index: {}]
  %s3 = inlined_call_operand.vmem [shape: f32[32,128], index: 3, kind: input, shape index: {}]
  %s4 = inlined_call_operand.vmem [shape: f32[1,128], index: 4, kind: input, shape index: {}]
  %s5 = inlined_call_operand.hbm [shape: f32[2,128], index: 5, kind: output, shape index: {}]
  %s6 = sld [smem:[#allocation0]]
  $region34: #{tpu_custom_call.1} parent=0
    _
  %s8 = ssub.s32 1, %s6
  %s9 = scalar_select 0, %s8, %s6
  $region1: #{tpu_custom_call.1} parent=0
    #allocation2 [shape = 'u8[262144]{0}', space=vmem, size = 0x40000, scoped, tag = 'input window, operand 0, single buffered']
    #allocation3 [shape = 's32[1]{0}', space=sflag, size = 0x4, scoped, tag = 'scoped memory for tpu_custom_call.1']
    #allocation4 [shape = 's32[1]{0}', space=sflag, size = 0x4, scoped, tag = 'scoped memory for tpu_custom_call.1']
    #allocation5 [shape = 'u8[1024]{0}', space=vmem, size = 0x400, scoped, tag = 'output window, operand 0, single buffered']
    %10 = vsyncpa [#allocation3], 0
    %11 = vsyncpa [#allocation4], 0
    // Predicated region
    $region2: #{tpu_custom_call.1} parent=1 // pred_check
      _
    $region3: #{tpu_custom_call.1} parent=1 // pred_check_branch
      %13 = sbr.rel (0) target = $region5
    $region4: #{tpu_custom_call.1} parent=1 // pred_region
      %s15 = ssub.s32 8192, 8192
      %16 = vsyncadd [#allocation3], %s15
      %s17 = sshll.u32 [#allocation2], 4
      %s18 = int_to_ptr.vmem [resolvable:$true] %s17
      %23 = dma.hbm_to_vmem [thread:$0]  %s0, 8192, %s18, [#allocation3], 128, 128, 8
    $region5: #{tpu_custom_call.1} parent=1 // pred_fallthru
      _
    // Predicated region
    $region6: #{tpu_custom_call.1} parent=1 // pred_check
      _
    $region7: #{tpu_custom_call.1} parent=1 // pred_check_branch
      %25 = sbr.rel (0) target = $region9
    $region8: #{tpu_custom_call.1} parent=1 // pred_region
      _
    $region9: #{tpu_custom_call.1} parent=1 // pred_fallthru
      _
    // Predicated region
    $region10: #{tpu_custom_call.1} parent=1 // pred_check
      _
    $region11: #{tpu_custom_call.1} parent=1 // pred_check_branch
      %27 = sbr.rel (0) target = $region13
    $region12: #{tpu_custom_call.1} parent=1 // pred_region
      _
    $region13: #{tpu_custom_call.1} parent=1 // pred_fallthru
      _
    // Predicated region
    $region14: #{tpu_custom_call.1} parent=1 // pred_check
      _
    $region15: #{tpu_custom_call.1} parent=1 // pred_check_branch
      %29 = sbr.rel (0) target = $region17
    $region16: #{tpu_custom_call.1} parent=1 // pred_region
      _
    $region17: #{tpu_custom_call.1} parent=1 // pred_fallthru
      _
    // Predicated region
    $region18: #{tpu_custom_call.1} parent=1 // pred_check
      _
    $region19: #{tpu_custom_call.1} parent=1 // pred_check_branch
      %31 = sbr.rel (0) target = $region21
    $region20: #{tpu_custom_call.1} parent=1 // pred_region
      _
    $region21: #{tpu_custom_call.1} parent=1 // pred_fallthru
      _
    // Predicated region
    $region22: #{tpu_custom_call.1} parent=1 // pred_check
      _
    $region23: #{tpu_custom_call.1} parent=1 // pred_check_branch
      %33 = sbr.rel (0) target = $region25
    $region24: #{tpu_custom_call.1} parent=1 // pred_region
      %34 = dma.done [#allocation3], 8192
    $region25: #{tpu_custom_call.1} parent=1 // pred_fallthru
      _
    %v36 = vld [vmem:[#allocation2] sm:$0xff]
    %v37 = vld [vmem:[#allocation2 + $0x8] sm:$0xff]
    %v38 = vld [vmem:[#allocation2 + $0x10] sm:$0xff]
    %v39 = vld [vmem:[#allocation2 + $0x18] sm:$0xff]
    %v40 = vld [vmem:[#allocation2 + $0x20] sm:$0xff]
    %v41 = vld [vmem:[#allocation2 + $0x28] sm:$0xff]
    %v42 = vld [vmem:[#allocation2 + $0x30] sm:$0xff]
    %v43 = vld [vmem:[#allocation2 + $0x38] sm:$0xff]
    %v44 = vld [vmem:[#allocation2 + $0x40] sm:$0xff]
    %v45 = vld [vmem:[#allocation2 + $0x48] sm:$0xff]
    %v46 = vld [vmem:[#allocation2 + $0x50] sm:$0xff]
    %v47 = vld [vmem:[#allocation2 + $0x58] sm:$0xff]
    %v48 = vld [vmem:[#allocation2 + $0x60] sm:$0xff]
    %v49 = vld [vmem:[#allocation2 + $0x68] sm:$0xff]
    %v50 = vld [vmem:[#allocation2 + $0x70] sm:$0xff]
    %v51 = vld [vmem:[#allocation2 + $0x78] sm:$0xff]
    %v52 = vld [vmem:[#allocation2 + $0x80] sm:$0xff]
    %v53 = vld [vmem:[#allocation2 + $0x88] sm:$0xff]
    %v54 = vld [vmem:[#allocation2 + $0x90] sm:$0xff]
    %v55 = vld [vmem:[#allocation2 + $0x98] sm:$0xff]
    %v56 = vld [vmem:[#allocation2 + $0xa0] sm:$0xff]
    %v57 = vld [vmem:[#allocation2 + $0xa8] sm:$0xff]
    %v58 = vld [vmem:[#allocation2 + $0xb0] sm:$0xff]
    %v59 = vld [vmem:[#allocation2 + $0xb8] sm:$0xff]
    %v60 = vld [vmem:[#allocation2 + $0xc0] sm:$0xff]
    %v61 = vld [vmem:[#allocation2 + $0xc8] sm:$0xff]
    %v62 = vld [vmem:[#allocation2 + $0xd0] sm:$0xff]
    %v63 = vld [vmem:[#allocation2 + $0xd8] sm:$0xff]
    %v64 = vld [vmem:[#allocation2 + $0xe0] sm:$0xff]
    %v65 = vld [vmem:[#allocation2 + $0xe8] sm:$0xff]
    %v66 = vld [vmem:[#allocation2 + $0xf0] sm:$0xff]
    %v67 = vld [vmem:[#allocation2 + $0xf8] sm:$0xff]
    %v68 = vld [vmem:[#allocation2 + $0x100] sm:$0xff]
    %v69 = vld [vmem:[#allocation2 + $0x108] sm:$0xff]
    %v70 = vld [vmem:[#allocation2 + $0x110] sm:$0xff]
    %v71 = vld [vmem:[#allocation2 + $0x118] sm:$0xff]
    %v72 = vld [vmem:[#allocation2 + $0x120] sm:$0xff]
    %v73 = vld [vmem:[#allocation2 + $0x128] sm:$0xff]
    %v74 = vld [vmem:[#allocation2 + $0x130] sm:$0xff]
    %v75 = vld [vmem:[#allocation2 + $0x138] sm:$0xff]
    %v76 = vld [vmem:[#allocation2 + $0x140] sm:$0xff]
    %v77 = vld [vmem:[#allocation2 + $0x148] sm:$0xff]
    %v78 = vld [vmem:[#allocation2 + $0x150] sm:$0xff]
    %v79 = vld [vmem:[#allocation2 + $0x158] sm:$0xff]
    %v80 = vld [vmem:[#allocation2 + $0x160] sm:$0xff]
    %v81 = vld [vmem:[#allocation2 + $0x168] sm:$0xff]
    %v82 = vld [vmem:[#allocation2 + $0x170] sm:$0xff]
    %v83 = vld [vmem:[#allocation2 + $0x178] sm:$0xff]
    %v84 = vld [vmem:[#allocation2 + $0x180] sm:$0xff]
    %v85 = vld [vmem:[#allocation2 + $0x188] sm:$0xff]
    %v86 = vld [vmem:[#allocation2 + $0x190] sm:$0xff]
    %v87 = vld [vmem:[#allocation2 + $0x198] sm:$0xff]
    %v88 = vld [vmem:[#allocation2 + $0x1a0] sm:$0xff]
    %v89 = vld [vmem:[#allocation2 + $0x1a8] sm:$0xff]
    %v90 = vld [vmem:[#allocation2 + $0x1b0] sm:$0xff]
    %v91 = vld [vmem:[#allocation2 + $0x1b8] sm:$0xff]
    %v92 = vld [vmem:[#allocation2 + $0x1c0] sm:$0xff]
    %v93 = vld [vmem:[#allocation2 + $0x1c8] sm:$0xff]
    %v94 = vld [vmem:[#allocation2 + $0x1d0] sm:$0xff]
    %v95 = vld [vmem:[#allocation2 + $0x1d8] sm:$0xff]
    %v96 = vld [vmem:[#allocation2 + $0x1e0] sm:$0xff]
    %v97 = vld [vmem:[#allocation2 + $0x1e8] sm:$0xff]
    %v98 = vld [vmem:[#allocation2 + $0x1f0] sm:$0xff]
    %v99 = vld [vmem:[#allocation2 + $0x1f8] sm:$0xff]
    %v100 = vld [vmem:[%s1] sm:$0xf]
    %v101 = vld [vmem:[%s1 + $0x4] sm:$0xf]
    %v102 = vld [vmem:[%s1 + $0x8] sm:$0xf]
    %v103 = vld [vmem:[%s1 + $0xc] sm:$0xf]
    %v104 = vld [vmem:[%s1 + $0x10] sm:$0xf]
    %v105 = vld [vmem:[%s1 + $0x14] sm:$0xf]
    %v106 = vld [vmem:[%s1 + $0x18] sm:$0xf]
    %v107 = vld [vmem:[%s1 + $0x1c] sm:$0xf]
    %v108 = vld [vmem:[%s1 + $0x20] sm:$0xf]
    %v109 = vld [vmem:[%s1 + $0x24] sm:$0xf]
    %v110 = vld [vmem:[%s1 + $0x28] sm:$0xf]
    %v111 = vld [vmem:[%s1 + $0x2c] sm:$0xf]
    %v112 = vld [vmem:[%s1 + $0x30] sm:$0xf]
    %v113 = vld [vmem:[%s1 + $0x34] sm:$0xf]
    %v114 = vld [vmem:[%s1 + $0x38] sm:$0xf]
    %v115 = vld [vmem:[%s1 + $0x3c] sm:$0xf]
    %v116 = vld [vmem:[%s1 + $0x40] sm:$0xf]
    %v117 = vld [vmem:[%s1 + $0x44] sm:$0xf]
    %v118 = vld [vmem:[%s1 + $0x48] sm:$0xf]
    %v119 = vld [vmem:[%s1 + $0x4c] sm:$0xf]
    %v120 = vld [vmem:[%s1 + $0x50] sm:$0xf]
    %v121 = vld [vmem:[%s1 + $0x54] sm:$0xf]
    %v122 = vld [vmem:[%s1 + $0x58] sm:$0xf]
    %v123 = vld [vmem:[%s1 + $0x5c] sm:$0xf]
    %v124 = vld [vmem:[%s1 + $0x60] sm:$0xf]
    %v125 = vld [vmem:[%s1 + $0x64] sm:$0xf]
    %v126 = vld [vmem:[%s1 + $0x68] sm:$0xf]
    %v127 = vld [vmem:[%s1 + $0x6c] sm:$0xf]
    %v128 = vld [vmem:[%s1 + $0x70] sm:$0xf]
    %v129 = vld [vmem:[%s1 + $0x74] sm:$0xf]
    %v130 = vld [vmem:[%s1 + $0x78] sm:$0xf]
    %v131 = vld [vmem:[%s1 + $0x7c] sm:$0xf]
    %v132 = vld [vmem:[%s2] sm:$0x1]
    %v134 = vlaneseq
    %v135 = vshrl.u32 %v134, 7
    %v136 = vsub.s32 0, %v135
    %v137 = vrot.slane %v132, %v136
    %v203 = vunpack.c.l.b16 %v36
    %v204 = vunpack.c.h.b16 %v36
    %v205 = vunpack.c.l.b16 %v37
    %v206 = vunpack.c.h.b16 %v37
    %v207 = vunpack.c.l.b16 %v38
    %v208 = vunpack.c.h.b16 %v38
    %v209 = vunpack.c.l.b16 %v39
    %v210 = vunpack.c.h.b16 %v39
    %v211 = vunpack.c.l.b16 %v40
    %v212 = vunpack.c.h.b16 %v40
    %v213 = vunpack.c.l.b16 %v41
    %v214 = vunpack.c.h.b16 %v41
    %v215 = vunpack.c.l.b16 %v42
    %v216 = vunpack.c.h.b16 %v42
    %v217 = vunpack.c.l.b16 %v43
    %v218 = vunpack.c.h.b16 %v43
    %v219 = vunpack.c.l.b16 %v44
    %v220 = vunpack.c.h.b16 %v44
    %v221 = vunpack.c.l.b16 %v45
    %v222 = vunpack.c.h.b16 %v45
    %v223 = vunpack.c.l.b16 %v46
    %v224 = vunpack.c.h.b16 %v46
    %v225 = vunpack.c.l.b16 %v47
    %v226 = vunpack.c.h.b16 %v47
    %v227 = vunpack.c.l.b16 %v48
    %v228 = vunpack.c.h.b16 %v48
    %v229 = vunpack.c.l.b16 %v49
    %v230 = vunpack.c.h.b16 %v49
    %v231 = vunpack.c.l.b16 %v50
    %v232 = vunpack.c.h.b16 %v50
    %v233 = vunpack.c.l.b16 %v51
    %v234 = vunpack.c.h.b16 %v51
    %v235 = vunpack.c.l.b16 %v52
    %v236 = vunpack.c.h.b16 %v52
    %v237 = vunpack.c.l.b16 %v53
    %v238 = vunpack.c.h.b16 %v53
    %v239 = vunpack.c.l.b16 %v54
    %v240 = vunpack.c.h.b16 %v54
    %v241 = vunpack.c.l.b16 %v55
    %v242 = vunpack.c.h.b16 %v55
    %v243 = vunpack.c.l.b16 %v56
    %v244 = vunpack.c.h.b16 %v56
    %v245 = vunpack.c.l.b16 %v57
    %v246 = vunpack.c.h.b16 %v57
    %v247 = vunpack.c.l.b16 %v58
    %v248 = vunpack.c.h.b16 %v58
    %v249 = vunpack.c.l.b16 %v59
    %v250 = vunpack.c.h.b16 %v59
    %v251 = vunpack.c.l.b16 %v60
    %v252 = vunpack.c.h.b16 %v60
    %v253 = vunpack.c.l.b16 %v61
    %v254 = vunpack.c.h.b16 %v61
    %v255 = vunpack.c.l.b16 %v62
    %v256 = vunpack.c.h.b16 %v62
    %v257 = vunpack.c.l.b16 %v63
    %v258 = vunpack.c.h.b16 %v63
    %v259 = vunpack.c.l.b16 %v64
    %v260 = vunpack.c.h.b16 %v64
    %v261 = vunpack.c.l.b16 %v65
    %v262 = vunpack.c.h.b16 %v65
    %v263 = vunpack.c.l.b16 %v66
    %v264 = vunpack.c.h.b16 %v66
    %v265 = vunpack.c.l.b16 %v67
    %v266 = vunpack.c.h.b16 %v67
    %v267 = vunpack.c.l.b16 %v68
    %v268 = vunpack.c.h.b16 %v68
    %v269 = vunpack.c.l.b16 %v69
    %v270 = vunpack.c.h.b16 %v69
    %v271 = vunpack.c.l.b16 %v70
    %v272 = vunpack.c.h.b16 %v70
    %v273 = vunpack.c.l.b16 %v71
    %v274 = vunpack.c.h.b16 %v71
    %v275 = vunpack.c.l.b16 %v72
    %v276 = vunpack.c.h.b16 %v72
    %v277 = vunpack.c.l.b16 %v73
    %v278 = vunpack.c.h.b16 %v73
    %v279 = vunpack.c.l.b16 %v74
    %v280 = vunpack.c.h.b16 %v74
    %v281 = vunpack.c.l.b16 %v75
    %v282 = vunpack.c.h.b16 %v75
    %v283 = vunpack.c.l.b16 %v76
    %v284 = vunpack.c.h.b16 %v76
    %v285 = vunpack.c.l.b16 %v77
    %v286 = vunpack.c.h.b16 %v77
    %v287 = vunpack.c.l.b16 %v78
    %v288 = vunpack.c.h.b16 %v78
    %v289 = vunpack.c.l.b16 %v79
    %v290 = vunpack.c.h.b16 %v79
    %v291 = vunpack.c.l.b16 %v80
    %v292 = vunpack.c.h.b16 %v80
    %v293 = vunpack.c.l.b16 %v81
    %v294 = vunpack.c.h.b16 %v81
    %v295 = vunpack.c.l.b16 %v82
    %v296 = vunpack.c.h.b16 %v82
    %v297 = vunpack.c.l.b16 %v83
    %v298 = vunpack.c.h.b16 %v83
    %v299 = vunpack.c.l.b16 %v84
    %v300 = vunpack.c.h.b16 %v84
    %v301 = vunpack.c.l.b16 %v85
    %v302 = vunpack.c.h.b16 %v85
    %v303 = vunpack.c.l.b16 %v86
    %v304 = vunpack.c.h.b16 %v86
    %v305 = vunpack.c.l.b16 %v87
    %v306 = vunpack.c.h.b16 %v87
    %v307 = vunpack.c.l.b16 %v88
    %v308 = vunpack.c.h.b16 %v88
    %v309 = vunpack.c.l.b16 %v89
    %v310 = vunpack.c.h.b16 %v89
    %v311 = vunpack.c.l.b16 %v90
    %v312 = vunpack.c.h.b16 %v90
    %v313 = vunpack.c.l.b16 %v91
    %v314 = vunpack.c.h.b16 %v91
    %v315 = vunpack.c.l.b16 %v92
    %v316 = vunpack.c.h.b16 %v92
    %v317 = vunpack.c.l.b16 %v93
    %v318 = vunpack.c.h.b16 %v93
    %v319 = vunpack.c.l.b16 %v94
    %v320 = vunpack.c.h.b16 %v94
    %v321 = vunpack.c.l.b16 %v95
    %v322 = vunpack.c.h.b16 %v95
    %v323 = vunpack.c.l.b16 %v96
    %v324 = vunpack.c.h.b16 %v96
    %v325 = vunpack.c.l.b16 %v97
    %v326 = vunpack.c.h.b16 %v97
    %v327 = vunpack.c.l.b16 %v98
    %v328 = vunpack.c.h.b16 %v98
    %v329 = vunpack.c.l.b16 %v99
    %v330 = vunpack.c.h.b16 %v99
    %v331 = vpack.c.b16 %v205, %v203
    %v332 = vpack.c.b16 %v206, %v204
    %v333 = vpack.c.b16 %v209, %v207
    %v334 = vpack.c.b16 %v210, %v208
    %v335 = vpack.c.b16 %v213, %v211
    %v336 = vpack.c.b16 %v214, %v212
    %v337 = vpack.c.b16 %v217, %v215
    %v338 = vpack.c.b16 %v218, %v216
    %v339 = vpack.c.b16 %v221, %v219
    %v340 = vpack.c.b16 %v222, %v220
    %v341 = vpack.c.b16 %v225, %v223
    %v342 = vpack.c.b16 %v226, %v224
    %v343 = vpack.c.b16 %v229, %v227
    %v344 = vpack.c.b16 %v230, %v228
    %v345 = vpack.c.b16 %v233, %v231
    %v346 = vpack.c.b16 %v234, %v232
    %v347 = vpack.c.b16 %v237, %v235
    %v348 = vpack.c.b16 %v238, %v236
    %v349 = vpack.c.b16 %v241, %v239
    %v350 = vpack.c.b16 %v242, %v240
    %v351 = vpack.c.b16 %v245, %v243
    %v352 = vpack.c.b16 %v246, %v244
    %v353 = vpack.c.b16 %v249, %v247
    %v354 = vpack.c.b16 %v250, %v248
    %v355 = vpack.c.b16 %v253, %v251
    %v356 = vpack.c.b16 %v254, %v252
    %v357 = vpack.c.b16 %v257, %v255
    %v358 = vpack.c.b16 %v258, %v256
    %v359 = vpack.c.b16 %v261, %v259
    %v360 = vpack.c.b16 %v262, %v260
    %v361 = vpack.c.b16 %v265, %v263
    %v362 = vpack.c.b16 %v266, %v264
    %v363 = vpack.c.b16 %v269, %v267
    %v364 = vpack.c.b16 %v270, %v268
    %v365 = vpack.c.b16 %v273, %v271
    %v366 = vpack.c.b16 %v274, %v272
    %v367 = vpack.c.b16 %v277, %v275
    %v368 = vpack.c.b16 %v278, %v276
    %v369 = vpack.c.b16 %v281, %v279
    %v370 = vpack.c.b16 %v282, %v280
    %v371 = vpack.c.b16 %v285, %v283
    %v372 = vpack.c.b16 %v286, %v284
    %v373 = vpack.c.b16 %v289, %v287
    %v374 = vpack.c.b16 %v290, %v288
    %v375 = vpack.c.b16 %v293, %v291
    %v376 = vpack.c.b16 %v294, %v292
    %v377 = vpack.c.b16 %v297, %v295
    %v378 = vpack.c.b16 %v298, %v296
    %v379 = vpack.c.b16 %v301, %v299
    %v380 = vpack.c.b16 %v302, %v300
    %v381 = vpack.c.b16 %v305, %v303
    %v382 = vpack.c.b16 %v306, %v304
    %v383 = vpack.c.b16 %v309, %v307
    %v384 = vpack.c.b16 %v310, %v308
    %v385 = vpack.c.b16 %v313, %v311
    %v386 = vpack.c.b16 %v314, %v312
    %v387 = vpack.c.b16 %v317, %v315
    %v388 = vpack.c.b16 %v318, %v316
    %v389 = vpack.c.b16 %v321, %v319
    %v390 = vpack.c.b16 %v322, %v320
    %v391 = vpack.c.b16 %v325, %v323
    %v392 = vpack.c.b16 %v326, %v324
    %v393 = vpack.c.b16 %v329, %v327
    %v394 = vpack.c.b16 %v330, %v328
    %v491 = vunpack.c.l.b16 %v100
    %v492 = vunpack.c.l.b16 %v101
    %v493 = vunpack.c.l.b16 %v102
    %v494 = vunpack.c.l.b16 %v103
    %v495 = vunpack.c.l.b16 %v104
    %v496 = vunpack.c.l.b16 %v105
    %v497 = vunpack.c.l.b16 %v106
    %v498 = vunpack.c.l.b16 %v107
    %v499 = vunpack.c.l.b16 %v108
    %v500 = vunpack.c.l.b16 %v109
    %v501 = vunpack.c.l.b16 %v110
    %v502 = vunpack.c.l.b16 %v111
    %v503 = vunpack.c.l.b16 %v112
    %v504 = vunpack.c.l.b16 %v113
    %v505 = vunpack.c.l.b16 %v114
    %v506 = vunpack.c.l.b16 %v115
    %v507 = vunpack.c.l.b16 %v116
    %v508 = vunpack.c.l.b16 %v117
    %v509 = vunpack.c.l.b16 %v118
    %v510 = vunpack.c.l.b16 %v119
    %v511 = vunpack.c.l.b16 %v120
    %v512 = vunpack.c.l.b16 %v121
    %v513 = vunpack.c.l.b16 %v122
    %v514 = vunpack.c.l.b16 %v123
    %v515 = vunpack.c.l.b16 %v124
    %v516 = vunpack.c.l.b16 %v125
    %v517 = vunpack.c.l.b16 %v126
    %v518 = vunpack.c.l.b16 %v127
    %v519 = vunpack.c.l.b16 %v128
    %v520 = vunpack.c.l.b16 %v129
    %v521 = vunpack.c.l.b16 %v130
    %v522 = vunpack.c.l.b16 %v131
    %v523 = vpack.c.b16 %v492, %v491
    %v524 = vpack.c.b16 %v494, %v493
    %v525 = vpack.c.b16 %v496, %v495
    %v526 = vpack.c.b16 %v498, %v497
    %v527 = vpack.c.b16 %v500, %v499
    %v528 = vpack.c.b16 %v502, %v501
    %v529 = vpack.c.b16 %v504, %v503
    %v530 = vpack.c.b16 %v506, %v505
    %v531 = vpack.c.b16 %v508, %v507
    %v532 = vpack.c.b16 %v510, %v509
    %v533 = vpack.c.b16 %v512, %v511
    %v534 = vpack.c.b16 %v514, %v513
    %v535 = vpack.c.b16 %v516, %v515
    %v536 = vpack.c.b16 %v518, %v517
    %v537 = vpack.c.b16 %v520, %v519
    %v538 = vpack.c.b16 %v522, %v521
    %555 = vmatprep.subr.bf16.mxu0 0
    %556 = vmatpush1.bf16.msra.mxu0 %v523
    %557 = vmatprep.subr.bf16.mxu0 0
    %558 = vmatpush1.bf16.msra.mxu0 %v524
    %559 = vmatprep.subr.bf16.mxu0 0
    %560 = vmatpush1.bf16.msra.mxu0 %v525
    %561 = vmatprep.subr.bf16.mxu0 0
    %562 = vmatpush1.bf16.msra.mxu0 %v526
    %563 = vmatprep.subr.bf16.mxu0 0
    %564 = vmatpush1.bf16.msra.mxu0 %v527
    %565 = vmatprep.subr.bf16.mxu0 0
    %566 = vmatpush1.bf16.msra.mxu0 %v528
    %567 = vmatprep.subr.bf16.mxu0 0
    %568 = vmatpush1.bf16.msra.mxu0 %v529
    %569 = vmatprep.subr.bf16.mxu0 0
    %570 = vmatpush1.bf16.msra.mxu0 %v530
    %571 = vmatprep.subr.bf16.mxu0 0
    %572 = vmatpush1.bf16.msra.mxu0 %v531
    %573 = vmatprep.subr.bf16.mxu0 0
    %574 = vmatpush1.bf16.msra.mxu0 %v532
    %575 = vmatprep.subr.bf16.mxu0 0
    %576 = vmatpush1.bf16.msra.mxu0 %v533
    %577 = vmatprep.subr.bf16.mxu0 0
    %578 = vmatpush1.bf16.msra.mxu0 %v534
    %579 = vmatprep.subr.bf16.mxu0 0
    %580 = vmatpush1.bf16.msra.mxu0 %v535
    %581 = vmatprep.subr.bf16.mxu0 0
    %582 = vmatpush1.bf16.msra.mxu0 %v536
    %583 = vmatprep.subr.bf16.mxu0 0
    %584 = vmatpush1.bf16.msra.mxu0 %v537
    %585 = vmatprep.subr.bf16.mxu0 0
    %586 = vmatpush1.bf16.msra.mxu0 %v538
    %587 = vmatprep.mubr.bf16.mxu0 %v332
    %588 = vmatmul.mubr.bf16.gmra.mrb[0].mxu0 %v331
    %v589 = vpop.f32.mrb[0].mxu0
    %v590 = vadd.f32 %v137, %v589
    %v591 = vpop.f32.mrb[0].mxu0
    %v592 = vpop.f32.mrb[0].mxu0
    %v593 = vadd.f32 %v137, %v592
    %v594 = vpop.f32.mrb[0].mxu0
    %595 = vmatprep.mubr.bf16.mxu0 %v334
    %596 = vmatmul.mubr.bf16.gmra.mrb[0].mxu0 %v333
    %v597 = vpop.f32.mrb[0].mxu0
    %v598 = vadd.f32 %v137, %v597
    %v599 = vpop.f32.mrb[0].mxu0
    %v600 = vpop.f32.mrb[0].mxu0
    %v601 = vadd.f32 %v137, %v600
    %v602 = vpop.f32.mrb[0].mxu0
    %603 = vmatprep.mubr.bf16.mxu0 %v336
    %604 = vmatmul.mubr.bf16.gmra.mrb[0].mxu0 %v335
    %v605 = vpop.f32.mrb[0].mxu0
    %v606 = vadd.f32 %v137, %v605
    %v607 = vpop.f32.mrb[0].mxu0
    %v608 = vpop.f32.mrb[0].mxu0
    %v609 = vadd.f32 %v137, %v608
    %v610 = vpop.f32.mrb[0].mxu0
    %611 = vmatprep.mubr.bf16.mxu0 %v338
    %612 = vmatmul.mubr.bf16.gmra.mrb[0].mxu0 %v337
    %v613 = vpop.f32.mrb[0].mxu0
    %v614 = vadd.f32 %v137, %v613
    %v615 = vpop.f32.mrb[0].mxu0
    %v616 = vpop.f32.mrb[0].mxu0
    %v617 = vadd.f32 %v137, %v616
    %v618 = vpop.f32.mrb[0].mxu0
    %619 = vmatprep.mubr.bf16.mxu0 %v340
    %620 = vmatmul.mubr.bf16.gmra.mrb[0].mxu0 %v339
    %v621 = vpop.f32.mrb[0].mxu0
    %v622 = vadd.f32 %v137, %v621
    %v623 = vpop.f32.mrb[0].mxu0
    %v624 = vpop.f32.mrb[0].mxu0
    %v625 = vadd.f32 %v137, %v624
    %v626 = vpop.f32.mrb[0].mxu0
    %627 = vmatprep.mubr.bf16.mxu0 %v342
    %628 = vmatmul.mubr.bf16.gmra.mrb[0].mxu0 %v341
    %v629 = vpop.f32.mrb[0].mxu0
    %v630 = vadd.f32 %v137, %v629
    %v631 = vpop.f32.mrb[0].mxu0
    %v632 = vpop.f32.mrb[0].mxu0
    %v633 = vadd.f32 %v137, %v632
    %v634 = vpop.f32.mrb[0].mxu0
    %635 = vmatprep.mubr.bf16.mxu0 %v344
    %636 = vmatmul.mubr.bf16.gmra.mrb[0].mxu0 %v343
    %v637 = vpop.f32.mrb[0].mxu0
    %v638 = vadd.f32 %v137, %v637
    %v639 = vpop.f32.mrb[0].mxu0
    %v640 = vpop.f32.mrb[0].mxu0
    %v641 = vadd.f32 %v137, %v640
    %v642 = vpop.f32.mrb[0].mxu0
    %643 = vmatprep.mubr.bf16.mxu0 %v346
    %644 = vmatmul.mubr.bf16.gmra.mrb[0].mxu0 %v345
    %v645 = vpop.f32.mrb[0].mxu0
    %v646 = vadd.f32 %v137, %v645
    %v647 = vpop.f32.mrb[0].mxu0
    %v648 = vpop.f32.mrb[0].mxu0
    %v649 = vadd.f32 %v137, %v648
    %v650 = vpop.f32.mrb[0].mxu0
    %651 = vmatprep.mubr.bf16.mxu0 %v348
    %652 = vmatmul.mubr.bf16.gmra.mrb[0].mxu0 %v347
    %v653 = vpop.f32.mrb[0].mxu0
    %v654 = vadd.f32 %v137, %v653
    %v655 = vpop.f32.mrb[0].mxu0
    %v656 = vpop.f32.mrb[0].mxu0
    %v657 = vadd.f32 %v137, %v656
    %v658 = vpop.f32.mrb[0].mxu0
    %659 = vmatprep.mubr.bf16.mxu0 %v350
    %660 = vmatmul.mubr.bf16.gmra.mrb[0].mxu0 %v349
    %v661 = vpop.f32.mrb[0].mxu0
    %v662 = vadd.f32 %v137, %v661
    %v663 = vpop.f32.mrb[0].mxu0
    %v664 = vpop.f32.mrb[0].mxu0
    %v665 = vadd.f32 %v137, %v664
    %v666 = vpop.f32.mrb[0].mxu0
    %667 = vmatprep.mubr.bf16.mxu0 %v352
    %668 = vmatmul.mubr.bf16.gmra.mrb[0].mxu0 %v351
    %v669 = vpop.f32.mrb[0].mxu0
    %v670 = vadd.f32 %v137, %v669
    %v671 = vpop.f32.mrb[0].mxu0
    %v672 = vpop.f32.mrb[0].mxu0
    %v673 = vadd.f32 %v137, %v672
    %v674 = vpop.f32.mrb[0].mxu0
    %675 = vmatprep.mubr.bf16.mxu0 %v354
    %676 = vmatmul.mubr.bf16.gmra.mrb[0].mxu0 %v353
    %v677 = vpop.f32.mrb[0].mxu0
    %v678 = vadd.f32 %v137, %v677
    %v679 = vpop.f32.mrb[0].mxu0
    %v680 = vpop.f32.mrb[0].mxu0
    %v681 = vadd.f32 %v137, %v680
    %v682 = vpop.f32.mrb[0].mxu0
    %683 = vmatprep.mubr.bf16.mxu0 %v356
    %684 = vmatmul.mubr.bf16.gmra.mrb[0].mxu0 %v355
    %v685 = vpop.f32.mrb[0].mxu0
    %v686 = vadd.f32 %v137, %v685
    %v687 = vpop.f32.mrb[0].mxu0
    %v688 = vpop.f32.mrb[0].mxu0
    %v689 = vadd.f32 %v137, %v688
    %v690 = vpop.f32.mrb[0].mxu0
    %691 = vmatprep.mubr.bf16.mxu0 %v358
    %692 = vmatmul.mubr.bf16.gmra.mrb[0].mxu0 %v357
    %v693 = vpop.f32.mrb[0].mxu0
    %v694 = vadd.f32 %v137, %v693
    %v695 = vpop.f32.mrb[0].mxu0
    %v696 = vpop.f32.mrb[0].mxu0
    %v697 = vadd.f32 %v137, %v696
    %v698 = vpop.f32.mrb[0].mxu0
    %699 = vmatprep.mubr.bf16.mxu0 %v360
    %700 = vmatmul.mubr.bf16.gmra.mrb[0].mxu0 %v359
    %v701 = vpop.f32.mrb[0].mxu0
    %v702 = vadd.f32 %v137, %v701
    %v703 = vpop.f32.mrb[0].mxu0
    %v704 = vpop.f32.mrb[0].mxu0
    %v705 = vadd.f32 %v137, %v704
    %v706 = vpop.f32.mrb[0].mxu0
    %707 = vmatprep.mubr.bf16.mxu0 %v362
    %708 = vmatmul.mubr.bf16.gmra.mrb[0].mxu0 %v361
    %v709 = vpop.f32.mrb[0].mxu0
    %v710 = vadd.f32 %v137, %v709
    %v711 = vpop.f32.mrb[0].mxu0
    %v712 = vpop.f32.mrb[0].mxu0
    %v713 = vadd.f32 %v137, %v712
    %v714 = vpop.f32.mrb[0].mxu0
    %715 = vmatprep.mubr.bf16.mxu0 %v364
    %716 = vmatmul.mubr.bf16.gmra.mrb[0].mxu0 %v363
    %v717 = vpop.f32.mrb[0].mxu0
    %v718 = vadd.f32 %v137, %v717
    %v719 = vpop.f32.mrb[0].mxu0
    %v720 = vpop.f32.mrb[0].mxu0
    %v721 = vadd.f32 %v137, %v720
    %v722 = vpop.f32.mrb[0].mxu0
    %723 = vmatprep.mubr.bf16.mxu0 %v366
    %724 = vmatmul.mubr.bf16.gmra.mrb[0].mxu0 %v365
    %v725 = vpop.f32.mrb[0].mxu0
    %v726 = vadd.f32 %v137, %v725
    %v727 = vpop.f32.mrb[0].mxu0
    %v728 = vpop.f32.mrb[0].mxu0
    %v729 = vadd.f32 %v137, %v728
    %v730 = vpop.f32.mrb[0].mxu0
    %731 = vmatprep.mubr.bf16.mxu0 %v368
    %732 = vmatmul.mubr.bf16.gmra.mrb[0].mxu0 %v367
    %v733 = vpop.f32.mrb[0].mxu0
    %v734 = vadd.f32 %v137, %v733
    %v735 = vpop.f32.mrb[0].mxu0
    %v736 = vpop.f32.mrb[0].mxu0
    %v737 = vadd.f32 %v137, %v736
    %v738 = vpop.f32.mrb[0].mxu0
    %739 = vmatprep.mubr.bf16.mxu0 %v370
    %740 = vmatmul.mubr.bf16.gmra.mrb[0].mxu0 %v369
    %v741 = vpop.f32.mrb[0].mxu0
    %v742 = vadd.f32 %v137, %v741
    %v743 = vpop.f32.mrb[0].mxu0
    %v744 = vpop.f32.mrb[0].mxu0
    %v745 = vadd.f32 %v137, %v744
    %v746 = vpop.f32.mrb[0].mxu0
    %747 = vmatprep.mubr.bf16.mxu0 %v372
    %748 = vmatmul.mubr.bf16.gmra.mrb[0].mxu0 %v371
    %v749 = vpop.f32.mrb[0].mxu0
    %v750 = vadd.f32 %v137, %v749
    %v751 = vpop.f32.mrb[0].mxu0
    %v752 = vpop.f32.mrb[0].mxu0
    %v753 = vadd.f32 %v137, %v752
    %v754 = vpop.f32.mrb[0].mxu0
    %755 = vmatprep.mubr.bf16.mxu0 %v374
    %756 = vmatmul.mubr.bf16.gmra.mrb[0].mxu0 %v373
    %v757 = vpop.f32.mrb[0].mxu0
    %v758 = vadd.f32 %v137, %v757
    %v759 = vpop.f32.mrb[0].mxu0
    %v760 = vpop.f32.mrb[0].mxu0
    %v761 = vadd.f32 %v137, %v760
    %v762 = vpop.f32.mrb[0].mxu0
    %763 = vmatprep.mubr.bf16.mxu0 %v376
    %764 = vmatmul.mubr.bf16.gmra.mrb[0].mxu0 %v375
    %v765 = vpop.f32.mrb[0].mxu0
    %v766 = vadd.f32 %v137, %v765
    %v767 = vpop.f32.mrb[0].mxu0
    %v768 = vpop.f32.mrb[0].mxu0
    %v769 = vadd.f32 %v137, %v768
    %v770 = vpop.f32.mrb[0].mxu0
    %771 = vmatprep.mubr.bf16.mxu0 %v378
    %772 = vmatmul.mubr.bf16.gmra.mrb[0].mxu0 %v377
    %v773 = vpop.f32.mrb[0].mxu0
    %v774 = vadd.f32 %v137, %v773
    %v775 = vpop.f32.mrb[0].mxu0
    %v776 = vpop.f32.mrb[0].mxu0
    %v777 = vadd.f32 %v137, %v776
    %v778 = vpop.f32.mrb[0].mxu0
    %779 = vmatprep.mubr.bf16.mxu0 %v380
    %780 = vmatmul.mubr.bf16.gmra.mrb[0].mxu0 %v379
    %v781 = vpop.f32.mrb[0].mxu0
    %v782 = vadd.f32 %v137, %v781
    %v783 = vpop.f32.mrb[0].mxu0
    %v784 = vpop.f32.mrb[0].mxu0
    %v785 = vadd.f32 %v137, %v784
    %v786 = vpop.f32.mrb[0].mxu0
    %787 = vmatprep.mubr.bf16.mxu0 %v382
    %788 = vmatmul.mubr.bf16.gmra.mrb[0].mxu0 %v381
    %v789 = vpop.f32.mrb[0].mxu0
    %v790 = vadd.f32 %v137, %v789
    %v791 = vpop.f32.mrb[0].mxu0
    %v792 = vpop.f32.mrb[0].mxu0
    %v793 = vadd.f32 %v137, %v792
    %v794 = vpop.f32.mrb[0].mxu0
    %795 = vmatprep.mubr.bf16.mxu0 %v384
    %796 = vmatmul.mubr.bf16.gmra.mrb[0].mxu0 %v383
    %v797 = vpop.f32.mrb[0].mxu0
    %v798 = vadd.f32 %v137, %v797
    %v799 = vpop.f32.mrb[0].mxu0
    %v800 = vpop.f32.mrb[0].mxu0
    %v801 = vadd.f32 %v137, %v800
    %v802 = vpop.f32.mrb[0].mxu0
    %803 = vmatprep.mubr.bf16.mxu0 %v386
    %804 = vmatmul.mubr.bf16.gmra.mrb[0].mxu0 %v385
    %v805 = vpop.f32.mrb[0].mxu0
    %v806 = vadd.f32 %v137, %v805
    %v807 = vpop.f32.mrb[0].mxu0
    %v808 = vpop.f32.mrb[0].mxu0
    %v809 = vadd.f32 %v137, %v808
    %v810 = vpop.f32.mrb[0].mxu0
    %811 = vmatprep.mubr.bf16.mxu0 %v388
    %812 = vmatmul.mubr.bf16.gmra.mrb[0].mxu0 %v387
    %v813 = vpop.f32.mrb[0].mxu0
    %v814 = vadd.f32 %v137, %v813
    %v815 = vpop.f32.mrb[0].mxu0
    %v816 = vpop.f32.mrb[0].mxu0
    %v817 = vadd.f32 %v137, %v816
    %v818 = vpop.f32.mrb[0].mxu0
    %819 = vmatprep.mubr.bf16.mxu0 %v390
    %820 = vmatmul.mubr.bf16.gmra.mrb[0].mxu0 %v389
    %v821 = vpop.f32.mrb[0].mxu0
    %v822 = vadd.f32 %v137, %v821
    %v823 = vpop.f32.mrb[0].mxu0
    %v824 = vpop.f32.mrb[0].mxu0
    %v825 = vadd.f32 %v137, %v824
    %v826 = vpop.f32.mrb[0].mxu0
    %827 = vmatprep.mubr.bf16.mxu0 %v392
    %828 = vmatmul.mubr.bf16.gmra.mrb[0].mxu0 %v391
    %v829 = vpop.f32.mrb[0].mxu0
    %v830 = vadd.f32 %v137, %v829
    %v831 = vpop.f32.mrb[0].mxu0
    %v832 = vpop.f32.mrb[0].mxu0
    %v833 = vadd.f32 %v137, %v832
    %v834 = vpop.f32.mrb[0].mxu0
    %835 = vmatprep.mubr.bf16.mxu0 %v394
    %836 = vmatmul.mubr.bf16.gmra.mrb[0].mxu0 %v393
    %v837 = vpop.f32.mrb[0].mxu0
    %v838 = vadd.f32 %v137, %v837
    %v839 = vpop.f32.mrb[0].mxu0
    %v840 = vpop.f32.mrb[0].mxu0
    %v841 = vadd.f32 %v137, %v840
    %v842 = vpop.f32.mrb[0].mxu0
    %843 = vdwg.mxu0
    %v844 = vmax.f32 %v590, 0.0
    %v845 = vmax.f32 %v593, 0.0
    %v846 = vmax.f32 %v598, 0.0
    %v847 = vmax.f32 %v601, 0.0
    %v848 = vmax.f32 %v606, 0.0
    %v849 = vmax.f32 %v609, 0.0
    %v850 = vmax.f32 %v614, 0.0
    %v851 = vmax.f32 %v617, 0.0
    %v852 = vmax.f32 %v622, 0.0
    %v853 = vmax.f32 %v625, 0.0
    %v854 = vmax.f32 %v630, 0.0
    %v855 = vmax.f32 %v633, 0.0
    %v856 = vmax.f32 %v638, 0.0
    %v857 = vmax.f32 %v641, 0.0
    %v858 = vmax.f32 %v646, 0.0
    %v859 = vmax.f32 %v649, 0.0
    %v860 = vmax.f32 %v654, 0.0
    %v861 = vmax.f32 %v657, 0.0
    %v862 = vmax.f32 %v662, 0.0
    %v863 = vmax.f32 %v665, 0.0
    %v864 = vmax.f32 %v670, 0.0
    %v865 = vmax.f32 %v673, 0.0
    %v866 = vmax.f32 %v678, 0.0
    %v867 = vmax.f32 %v681, 0.0
    %v868 = vmax.f32 %v686, 0.0
    %v869 = vmax.f32 %v689, 0.0
    %v870 = vmax.f32 %v694, 0.0
    %v871 = vmax.f32 %v697, 0.0
    %v872 = vmax.f32 %v702, 0.0
    %v873 = vmax.f32 %v705, 0.0
    %v874 = vmax.f32 %v710, 0.0
    %v875 = vmax.f32 %v713, 0.0
    %v876 = vmax.f32 %v718, 0.0
    %v877 = vmax.f32 %v721, 0.0
    %v878 = vmax.f32 %v726, 0.0
    %v879 = vmax.f32 %v729, 0.0
    %v880 = vmax.f32 %v734, 0.0
    %v881 = vmax.f32 %v737, 0.0
    %v882 = vmax.f32 %v742, 0.0
    %v883 = vmax.f32 %v745, 0.0
    %v884 = vmax.f32 %v750, 0.0
    %v885 = vmax.f32 %v753, 0.0
    %v886 = vmax.f32 %v758, 0.0
    %v887 = vmax.f32 %v761, 0.0
    %v888 = vmax.f32 %v766, 0.0
    %v889 = vmax.f32 %v769, 0.0
    %v890 = vmax.f32 %v774, 0.0
    %v891 = vmax.f32 %v777, 0.0
    %v892 = vmax.f32 %v782, 0.0
    %v893 = vmax.f32 %v785, 0.0
    %v894 = vmax.f32 %v790, 0.0
    %v895 = vmax.f32 %v793, 0.0
    %v896 = vmax.f32 %v798, 0.0
    %v897 = vmax.f32 %v801, 0.0
    %v898 = vmax.f32 %v806, 0.0
    %v899 = vmax.f32 %v809, 0.0
    %v900 = vmax.f32 %v814, 0.0
    %v901 = vmax.f32 %v817, 0.0
    %v902 = vmax.f32 %v822, 0.0
    %v903 = vmax.f32 %v825, 0.0
    %v904 = vmax.f32 %v830, 0.0
    %v905 = vmax.f32 %v833, 0.0
    %v906 = vmax.f32 %v838, 0.0
    %v907 = vmax.f32 %v841, 0.0
    %vm908 = vcmask 261120
    %v909 = vsel %vm908, %v844, 0.0
    %v910 = vsel %vm908, %v845, 0.0
    %v911 = vadd.f32 %v909, %v910
    %v912 = vsel %vm908, %v846, 0.0
    %v913 = vadd.f32 %v911, %v912
    %v914 = vsel %vm908, %v847, 0.0
    %v915 = vadd.f32 %v913, %v914
    %v916 = vsel %vm908, %v848, 0.0
    %v917 = vadd.f32 %v915, %v916
    %v918 = vsel %vm908, %v849, 0.0
    %v919 = vadd.f32 %v917, %v918
    %v920 = vsel %vm908, %v850, 0.0
    %v921 = vadd.f32 %v919, %v920
    %v922 = vsel %vm908, %v851, 0.0
    %v923 = vadd.f32 %v921, %v922
    %v924 = vsel %vm908, %v852, 0.0
    %v925 = vadd.f32 %v923, %v924
    %v926 = vsel %vm908, %v853, 0.0
    %v927 = vadd.f32 %v925, %v926
    %v928 = vsel %vm908, %v854, 0.0
    %v929 = vadd.f32 %v927, %v928
    %v930 = vsel %vm908, %v855, 0.0
    %v931 = vadd.f32 %v929, %v930
    %v932 = vsel %vm908, %v856, 0.0
    %v933 = vadd.f32 %v931, %v932
    %v934 = vsel %vm908, %v857, 0.0
    %v935 = vadd.f32 %v933, %v934
    %v936 = vsel %vm908, %v858, 0.0
    %v937 = vadd.f32 %v935, %v936
    %v938 = vsel %vm908, %v859, 0.0
    %v939 = vadd.f32 %v937, %v938
    %v940 = vsel %vm908, %v860, 0.0
    %v941 = vadd.f32 %v939, %v940
    %v942 = vsel %vm908, %v861, 0.0
    %v943 = vadd.f32 %v941, %v942
    %v944 = vsel %vm908, %v862, 0.0
    %v945 = vadd.f32 %v943, %v944
    %v946 = vsel %vm908, %v863, 0.0
    %v947 = vadd.f32 %v945, %v946
    %v948 = vsel %vm908, %v864, 0.0
    %v949 = vadd.f32 %v947, %v948
    %v950 = vsel %vm908, %v865, 0.0
    %v951 = vadd.f32 %v949, %v950
    %v952 = vsel %vm908, %v866, 0.0
    %v953 = vadd.f32 %v951, %v952
    %v954 = vsel %vm908, %v867, 0.0
    %v955 = vadd.f32 %v953, %v954
    %v956 = vsel %vm908, %v868, 0.0
    %v957 = vadd.f32 %v955, %v956
    %v958 = vsel %vm908, %v869, 0.0
    %v959 = vadd.f32 %v957, %v958
    %v960 = vsel %vm908, %v870, 0.0
    %v961 = vadd.f32 %v959, %v960
    %v962 = vsel %vm908, %v871, 0.0
    %v963 = vadd.f32 %v961, %v962
    %v964 = vsel %vm908, %v872, 0.0
    %v965 = vadd.f32 %v963, %v964
    %v966 = vsel %vm908, %v873, 0.0
    %v967 = vadd.f32 %v965, %v966
    %v968 = vsel %vm908, %v874, 0.0
    %v969 = vadd.f32 %v967, %v968
    %v970 = vsel %vm908, %v875, 0.0
    %v971 = vadd.f32 %v969, %v970
    %v972 = vrot.slane %v971, 4
    %v973 = vadd.f32 %v971, %v972
    %v974 = vrot.slane %v973, 2
    %v975 = vadd.f32 %v973, %v974
    %v976 = vrot.slane %v975, 1
    %v977 = vadd.f32 %v975, %v976
    %v978 = vsel %vm908, %v876, 0.0
    %v979 = vsel %vm908, %v877, 0.0
    %v980 = vadd.f32 %v978, %v979
    %v981 = vsel %vm908, %v878, 0.0
    %v982 = vadd.f32 %v980, %v981
    %v983 = vsel %vm908, %v879, 0.0
    %v984 = vadd.f32 %v982, %v983
    %v985 = vsel %vm908, %v880, 0.0
    %v986 = vadd.f32 %v984, %v985
    %v987 = vsel %vm908, %v881, 0.0
    %v988 = vadd.f32 %v986, %v987
    %v989 = vsel %vm908, %v882, 0.0
    %v990 = vadd.f32 %v988, %v989
    %v991 = vsel %vm908, %v883, 0.0
    %v992 = vadd.f32 %v990, %v991
    %v993 = vsel %vm908, %v884, 0.0
    %v994 = vadd.f32 %v992, %v993
    %v995 = vsel %vm908, %v885, 0.0
    %v996 = vadd.f32 %v994, %v995
    %v997 = vsel %vm908, %v886, 0.0
    %v998 = vadd.f32 %v996, %v997
    %v999 = vsel %vm908, %v887, 0.0
    %v1000 = vadd.f32 %v998, %v999
    %v1001 = vsel %vm908, %v888, 0.0
    %v1002 = vadd.f32 %v1000, %v1001
    %v1003 = vsel %vm908, %v889, 0.0
    %v1004 = vadd.f32 %v1002, %v1003
    %v1005 = vsel %vm908, %v890, 0.0
    %v1006 = vadd.f32 %v1004, %v1005
    %v1007 = vsel %vm908, %v891, 0.0
    %v1008 = vadd.f32 %v1006, %v1007
    %v1009 = vsel %vm908, %v892, 0.0
    %v1010 = vadd.f32 %v1008, %v1009
    %v1011 = vsel %vm908, %v893, 0.0
    %v1012 = vadd.f32 %v1010, %v1011
    %v1013 = vsel %vm908, %v894, 0.0
    %v1014 = vadd.f32 %v1012, %v1013
    %v1015 = vsel %vm908, %v895, 0.0
    %v1016 = vadd.f32 %v1014, %v1015
    %v1017 = vsel %vm908, %v896, 0.0
    %v1018 = vadd.f32 %v1016, %v1017
    %v1019 = vsel %vm908, %v897, 0.0
    %v1020 = vadd.f32 %v1018, %v1019
    %v1021 = vsel %vm908, %v898, 0.0
    %v1022 = vadd.f32 %v1020, %v1021
    %v1023 = vsel %vm908, %v899, 0.0
    %v1024 = vadd.f32 %v1022, %v1023
    %v1025 = vsel %vm908, %v900, 0.0
    %v1026 = vadd.f32 %v1024, %v1025
    %v1027 = vsel %vm908, %v901, 0.0
    %v1028 = vadd.f32 %v1026, %v1027
    %v1029 = vsel %vm908, %v902, 0.0
    %v1030 = vadd.f32 %v1028, %v1029
    %v1031 = vsel %vm908, %v903, 0.0
    %v1032 = vadd.f32 %v1030, %v1031
    %v1033 = vsel %vm908, %v904, 0.0
    %v1034 = vadd.f32 %v1032, %v1033
    %v1035 = vsel %vm908, %v905, 0.0
    %v1036 = vadd.f32 %v1034, %v1035
    %v1037 = vsel %vm908, %v906, 0.0
    %v1038 = vadd.f32 %v1036, %v1037
    %v1039 = vsel %vm908, %v907, 0.0
    %v1040 = vadd.f32 %v1038, %v1039
    %v1041 = vrot.slane %v1040, 4
    %v1042 = vadd.f32 %v1040, %v1041
    %v1043 = vrot.slane %v1042, 2
    %v1044 = vadd.f32 %v1042, %v1043
    %v1045 = vrot.slane %v1044, 1
    %v1046 = vadd.f32 %v1044, %v1045
    %v1047 = vmul.f32 %v977, 0.00390625
    %v1048 = vmul.f32 %v1046, 0.00390625
    %v1049 = vld [vmem:[%s3] sm:$0xff]
    %v1050 = vld [vmem:[%s3 + $0x8] sm:$0xff]
    %v1051 = vld [vmem:[%s3 + $0x10] sm:$0xff]
    %v1052 = vld [vmem:[%s3 + $0x18] sm:$0xff]
    %v1053 = vld [vmem:[%s4] sm:$0x1]
    %v1055 = vlaneseq
    %v1056 = vshrl.u32 %v1055, 7
    %v1057 = vsub.s32 0, %v1056
    %v1058 = vrot.slane %v1053, %v1057
    %vm1062 = vcmask 1041409
    %v1063 = vsel %vm1062, %v1048, %v1047
    %v1064 = vsel %vm908, %v1063, 0
    %1066 = vmatprep.subr.mxu0 0.0
    %1067 = vmatpush1.msra.mxu0 %v1049
    %1068 = vmatprep.subr.mxu0 0.0
    %1069 = vmatpush1.msra.mxu0 %v1050
    %1070 = vmatprep.subr.mxu0 0.0
    %1071 = vmatpush1.msra.mxu0 %v1051
    %1072 = vmatprep.subr.mxu0 0.0
    %1073 = vmatpush1.msra.mxu0 %v1052
    %1074 = vmatprep.subr.mxu0 0.0
    %1075 = vmatpush1.msra.mxu0 0.0
    %1076 = vmatprep.subr.mxu0 0.0
    %1077 = vmatpush1.msra.mxu0 0.0
    %1078 = vmatprep.subr.mxu0 0.0
    %1079 = vmatpush1.msra.mxu0 0.0
    %1080 = vmatprep.subr.mxu0 0.0
    %1081 = vmatpush1.msra.mxu0 0.0
    %1082 = vmatprep.subr.mxu0 0.0
    %1083 = vmatpush1.msra.mxu0 0.0
    %1084 = vmatprep.subr.mxu0 0.0
    %1085 = vmatpush1.msra.mxu0 0.0
    %1086 = vmatprep.subr.mxu0 0.0
    %1087 = vmatpush1.msra.mxu0 0.0
    %1088 = vmatprep.subr.mxu0 0.0
    %1089 = vmatpush1.msra.mxu0 0.0
    %1090 = vmatprep.subr.mxu0 0.0
    %1091 = vmatpush1.msra.mxu0 0.0
    %1092 = vmatprep.subr.mxu0 0.0
    %1093 = vmatpush1.msra.mxu0 0.0
    %1094 = vmatprep.subr.mxu0 0.0
    %1095 = vmatpush1.msra.mxu0 0.0
    %1096 = vmatprep.subr.mxu0 0.0
    %1097 = vmatpush1.msra.mxu0 0.0
    %1098 = vmatprep.subr.mxu0 0.0
    %1099 = vmatpush1.msra.mxu0 0.0
    %1100 = vmatprep.subr.mxu0 0.0
    %1101 = vmatpush1.msra.mxu0 0.0
    %1102 = vmatprep.subr.mxu0 0.0
    %1103 = vmatpush1.msra.mxu0 0.0
    %1104 = vmatprep.subr.mxu0 0.0
    %1105 = vmatpush1.msra.mxu0 0.0
    %1106 = vmatprep.subr.mxu0 0.0
    %1107 = vmatpush1.msra.mxu0 0.0
    %1108 = vmatprep.subr.mxu0 0.0
    %1109 = vmatpush1.msra.mxu0 0.0
    %1110 = vmatprep.subr.mxu0 0.0
    %1111 = vmatpush1.msra.mxu0 0.0
    %1112 = vmatprep.subr.mxu0 0.0
    %1113 = vmatpush1.msra.mxu0 0.0
    %1114 = vmatprep.subr.mxu0 0.0
    %1115 = vmatpush1.msra.mxu0 0.0
    %1116 = vmatprep.subr.mxu0 0.0
    %1117 = vmatpush1.msra.mxu0 0.0
    %1118 = vmatprep.subr.mxu0 0.0
    %1119 = vmatpush1.msra.mxu0 0.0
    %1120 = vmatprep.subr.mxu0 0.0
    %1121 = vmatpush1.msra.mxu0 0.0
    %1122 = vmatprep.subr.mxu0 0.0
    %1123 = vmatpush1.msra.mxu0 0.0
    %1124 = vmatprep.subr.mxu0 0.0
    %1125 = vmatpush1.msra.mxu0 0.0
    %1126 = vmatprep.subr.mxu0 0.0
    %1127 = vmatpush1.msra.mxu0 0.0
    %1128 = vmatprep.subr.mxu0 0.0
    %1129 = vmatpush1.msra.mxu0 0.0
    %1130 = vmatprep.mubr.f32.mxu0 0.0
    %1131 = vmatmul.mubr.f32.gmra.mrb[0].mxu0 %v1064
    %v1132 = vpop.f32.mrb[0].mxu0
    %v1133 = vadd.f32 %v1058, %v1132
    %v1134 = vpop.f32.mrb[0].mxu0
    %1135 = vdwg.mxu0
    %1136 = vst [vmem:[#allocation5] sm:$0x3] %v1133
    // Predicated region
    $region26: #{tpu_custom_call.1} parent=1 // pred_check
      _
    $region27: #{tpu_custom_call.1} parent=1 // pred_check_branch
      %1138 = sbr.rel (0) target = $region29
    $region28: #{tpu_custom_call.1} parent=1 // pred_region
      %s1140 = ssub.s32 32, 32
      %1141 = vsyncadd [#allocation4], %s1140
      %s1143 = sshll.u32 [#allocation5], 4
      %s1144 = int_to_ptr.vmem [resolvable:$true] %s1143
      %1146 = dma.vmem_to_hbm [thread:$0]  %s1144, 32, %s5, [#allocation4]
    $region29: #{tpu_custom_call.1} parent=1 // pred_fallthru
      _
    // Predicated region
    $region30: #{tpu_custom_call.1} parent=1 // pred_check
      _
    $region31: #{tpu_custom_call.1} parent=1 // pred_check_branch
      %1148 = sbr.rel (0) target = $region33
    $region32: #{tpu_custom_call.1} parent=1 // pred_region
      %1149 = dma.done [#allocation4], 32
    $region33: #{tpu_custom_call.1} parent=1 // pred_fallthru
      _
    %1150 = vsyncpa [#allocation3], 1
    %1151 = vsyncpa [#allocation4], 1

</llo_original>
